<compile_context>
chip_gen: v7x
topology: tpu7x:2x2x1
jax: 0.10.0
libtpu: 0.0.40
codegen_flags: <defaults>
</compile_context>

<pallas_src>
import math
from typing import NamedTuple

import jax
import jax.numpy as jnp
from jax.experimental import pallas as pl
from jax.experimental.pallas import tpu as pltpu


def _round_up(a: int, b: int) -> int:
    return -(-a // b) * b


def _vmem_capacity_bytes() -> int:
    """Physical per-core VMEM; conservative (v7x, 64 MiB) fallback if query fails."""
    try:
        return int(pltpu.get_tpu_info().vmem_capacity_bytes)
    except Exception:
        return 64 * 1024 * 1024


def siren_kernel(x_ref, wt_ref, b_ref, o_ref):
    # x_ref : (tm, din_p)   row tile of inputs (f32 or bf16)
    # wt_ref: (din_p, tn)   column tile of w0*W^T; block index is constant over
    #                       the inner row axis -> DMA'd once per column tile.
    # b_ref : (1, tn)       w0*bias tile (f32)
    # o_ref : (tm, tn)      output tile, lane-dense (tn % 128 == 0)
    acc = jnp.dot(x_ref[...], wt_ref[...], preferred_element_type=jnp.float32)
    acc = acc + b_ref[...]                              # bias add in f32
    o_ref[...] = jnp.sin(acc).astype(o_ref.dtype)       # w0 already folded into W, b


class SirenParams(NamedTuple):
    wt: jax.Array       # (din_p, dout_p) = w0 * W^T, padded, MXU dtype
    b: jax.Array        # (1, dout_p)     = w0 * bias, padded, f32
    dim_in: int
    dim_out: int
    tn: int             # output-column tile (multiple of 128)


def prepare_siren_params(weight, bias=None, w0=1.0, *,
                         mxu_dtype=jnp.bfloat16, tn=512) -> SirenParams:
    """One-time parameter prep (transpose + pad + fold w0 + cast), hoisted
    out of the per-call path."""
    weight = jnp.asarray(weight, jnp.float32)
    dim_out, dim_in = weight.shape
    mxu_dtype = jnp.dtype(mxu_dtype)
    sub = 32 // mxu_dtype.itemsize            # sublane multiple: 8 (f32) / 16 (bf16)

    # Reduction dim: lane-dense for hidden-sized layers, cheap sublane pad for
    # tiny coordinate inputs (that case is HBM-writeback bound anyway).
    if dim_in >= 64:
        din_p = _round_up(dim_in, 128)
    else:
        din_p = _round_up(max(dim_in, sub), sub)

    dout_p = _round_up(max(dim_out, 128), 128)      # lane-dense output (unmasked vst)
    if din_p * dout_p * mxu_dtype.itemsize <= 4 * 1024 * 1024:
        tn_eff = dout_p                             # whole W^T stays VMEM-resident
    else:
        tn_eff = min(_round_up(tn, 128), dout_p)    # tile wide layers along dout
        dout_p = _round_up(dout_p, tn_eff)

    wt = weight.T * jnp.float32(w0)                 # fold w0 into the weight
    wt = jnp.pad(wt, ((0, din_p - dim_in), (0, dout_p - dim_out))).astype(mxu_dtype)

    if bias is None:
        b2 = jnp.zeros((1, dout_p), jnp.float32)
    else:
        b2 = jnp.asarray(bias, jnp.float32) * jnp.float32(w0)
        b2 = jnp.pad(b2, (0, dout_p - dim_out)).reshape(1, dout_p)

    return SirenParams(wt=wt, b=b2, dim_in=dim_in, dim_out=dim_out, tn=tn_eff)


def siren_apply(x, params: SirenParams, *, tm=None):
    """Returns sin(x @ (w0*W^T) + w0*b), shape (N, dim_out)."""
    N, dim_in = x.shape
    assert dim_in == params.dim_in
    wt, b2 = params.wt, params.b
    din_p, dout_p = wt.shape
    tn = params.tn
    d_tiles = dout_p // tn

    x_isz = wt.dtype.itemsize                 # x is cast to the MXU dtype
    out_isz = 4                               # f32 output
    row_align = 32 // x_isz                   # 8 (f32) / 16 (bf16) sublanes

    vmem_phys = _vmem_capacity_bytes()
    vmem_cap = min(int(0.85 * vmem_phys), 100 * 1024 * 1024)

    # Default row tile: 1024 on 128-MiB-VMEM parts (v5e/v6e), 512 on v7x.
    if tm is None:
        tm = 1024 if vmem_phys >= 96 * 1024 * 1024 else 512

    # Adaptive row tile: aim for >= ~4 row steps so the pipeline actually
    # overlaps DMA/compute and both v7x TensorCores get row work, instead of
    # collapsing to grid=(1,) for small/medium N.
    tm_cap = max(_round_up(pl.cdiv(N, 4), row_align), row_align)
    tm_eff = min(_round_up(tm, row_align), tm_cap)

    def vmem_need(tm_):
        return (2 * tm_ * din_p * x_isz       # double-buffered x tile
                + 2 * tm_ * tn * out_isz      # double-buffered out tile
                + 2 * din_p * tn * x_isz      # W^T tile (grid-invariant)
                + 2 * tn * 4)                 # bias tile

    # Shrink the row tile until it fits under the generation-aware VMEM cap.
    while vmem_need(tm_eff) > vmem_cap and tm_eff > row_align:
        tm_eff = max(row_align, _round_up(tm_eff // 2, row_align))

    n_pad = _round_up(N, tm_eff)
    n_tiles = n_pad // tm_eff

    need = vmem_need(tm_eff)
    vmem_limit = None
    if need > 30 * 1024 * 1024:               # only raise the scoped limit when required
        vmem_limit = min(int(need * 1.5), vmem_cap)

    # Pad x only when actually required (skips the extra HBM pass otherwise).
    if n_pad != N or din_p != dim_in:
        xp = jnp.pad(x, ((0, n_pad - N), (0, din_p - dim_in)))
    else:
        xp = x
    if xp.dtype != wt.dtype:
        xp = xp.astype(wt.dtype)

    cost = pl.CostEstimate(
        flops=2 * n_pad * din_p * dout_p,
        transcendentals=n_pad * dout_p,
        bytes_accessed=(x_isz * n_pad * din_p * d_tiles    # x re-streamed per column tile
                        + x_isz * din_p * dout_p           # W^T read once
                        + 4 * dout_p                       # bias
                        + out_isz * n_pad * dout_p),       # output written once
    )

    out_p = pl.pallas_call(
        siren_kernel,
        out_shape=jax.ShapeDtypeStruct((n_pad, dout_p), jnp.float32),
        grid_spec=pltpu.PrefetchScalarGridSpec(
            num_scalar_prefetch=0,
            # Column axis j is OUTER, row axis i INNER: the W^T / bias block
            # indices are constant across i, so they are DMA'd once per column
            # tile and stay VMEM-resident while all row tiles stream through.
            grid=(d_tiles, n_tiles),
            in_specs=[
                pl.BlockSpec((tm_eff, din_p), lambda j, i: (i, 0)),   # x row tile
                pl.BlockSpec((din_p, tn), lambda j, i: (0, j)),       # w0*W^T col tile
                pl.BlockSpec((1, tn), lambda j, i: (0, j)),           # w0*bias tile
            ],
            out_specs=pl.BlockSpec((tm_eff, tn), lambda j, i: (i, j)),
        ),
        compiler_params=pltpu.CompilerParams(
            dimension_semantics=("parallel", "parallel"),   # megacore-shardable
            vmem_limit_bytes=vmem_limit,
        ),
        cost_estimate=cost,
    )(xp, wt, b2)

    # Slice away row / feature padding (plain-JAX glue).
    return out_p[:N, :params.dim_out]


def siren_forward(x, weight, bias=None, w0=1.0, *,
                  mxu_dtype=jnp.bfloat16, tm=None, tn=512):
    """Convenience wrapper: sin(w0 * (x @ weight.T + bias)), PyTorch layout."""
    params = prepare_siren_params(weight, bias, w0, mxu_dtype=mxu_dtype, tn=tn)
    return siren_apply(x, params, tm=tm)


def init_siren_params(key, dim_in, dim_out, w0=1.0, c=6.0, is_first=False):
    """Deterministic SIREN init matching the PyTorch module's init_()."""
    w_std = (1.0 / dim_in) if is_first else (math.sqrt(c / dim_in) / w0)
    kw, _ = jax.random.split(key)
    weight = jax.random.uniform(
        kw, (dim_out, dim_in), minval=-w_std, maxval=w_std, dtype=jnp.float32)
    bias = jnp.zeros((dim_out,), dtype=jnp.float32)   # torch init_ only touches weight
    return weight, bias


if __name__ == "__main__":
    key = jax.random.PRNGKey(0)
    k_x, k_p = jax.random.split(key)

    # Small shapes consistent with a coordinate-SIREN first layer.
    N, dim_in, dim_out = 16, 4, 32
    w0 = 30.0

    x = jax.random.normal(k_x, (N, dim_in), dtype=jnp.float32)
    weight, bias = init_siren_params(k_p, dim_in, dim_out, w0=w0, is_first=True)

    # Exact f32 MXU path: tight check against the PyTorch-equivalent reference.
    out_f32 = jax.block_until_ready(
        siren_forward(x, weight, bias, w0=w0, mxu_dtype=jnp.float32))
    ref_f32 = jnp.sin(w0 * (x @ weight.T + bias[None, :]))
    assert out_f32.shape == (N, dim_out)
    assert jnp.allclose(out_f32, ref_f32, atol=1e-4, rtol=1e-4), (
        float(jnp.max(jnp.abs(out_f32 - ref_f32))))

    # bf16 MXU path (default perf config): prepared params reused across calls.
    params_bf16 = prepare_siren_params(weight, bias, w0=w0, mxu_dtype=jnp.bfloat16)
    out_bf16 = jax.block_until_ready(siren_apply(x, params_bf16))
    ref_bf16 = jnp.sin(
        jnp.dot(x.astype(jnp.bfloat16), (w0 * weight.T).astype(jnp.bfloat16),
                preferred_element_type=jnp.float32) + w0 * bias[None, :])
    assert out_bf16.shape == (N, dim_out)
    assert jnp.allclose(out_bf16, ref_bf16, atol=2e-2, rtol=2e-2), (
        float(jnp.max(jnp.abs(out_bf16 - ref_bf16))))

    print("KERNEL_OK")
</pallas_src>

<mosaic_0001>
module attributes {stable_mosaic.version = 11 : i64} {
  func.func @siren_kernel(%arg0: i32, %arg1: i32, %arg2: memref<8x8xf32, #tpu.memory_space<vmem>>, %arg3: memref<8x128xf32, #tpu.memory_space<vmem>>, %arg4: memref<1x128xf32, #tpu.memory_space<vmem>>, %arg5: memref<8x128xf32, #tpu.memory_space<vmem>>) attributes {dimension_semantics = [#tpu.dimension_semantics<parallel>, #tpu.dimension_semantics<parallel>], iteration_bounds = array<i64: 1, 2>, scalar_prefetch = 0 : i64, scratch_operands = 0 : i64, tpu.core_type = #tpu.core_type<tc>, window_params = [{transform_indices = @transform_0, window_bounds = array<i64: 8, 8>}, {transform_indices = @transform_1, window_bounds = array<i64: 8, 128>}, {transform_indices = @transform_2, window_bounds = array<i64: 1, 128>}, {transform_indices = @transform_3, window_bounds = array<i64: 8, 128>}]} {
    %c0 = arith.constant 0 : index
    %c0_0 = arith.constant 0 : index
    %0 = vector.load %arg2[%c0, %c0_0] : memref<8x8xf32, #tpu.memory_space<vmem>>, vector<8x8xf32>
    %c0_1 = arith.constant 0 : index
    %c0_2 = arith.constant 0 : index
    %1 = vector.load %arg3[%c0_1, %c0_2] : memref<8x128xf32, #tpu.memory_space<vmem>>, vector<8x128xf32>
    %cst = arith.constant dense<0.000000e+00> : vector<8x128xf32>
    %2 = tpu.matmul %0, %1, %cst {dimension_numbers = #tpu.dot_dimension_numbers<[1], [0], [0], [1], [0, 0, 1, 1], [], []>} : vector<8x8xf32>, vector<8x128xf32>, vector<8x128xf32> -> vector<8x128xf32>
    %c0_3 = arith.constant 0 : index
    %c0_4 = arith.constant 0 : index
    %3 = vector.load %arg4[%c0_3, %c0_4] : memref<1x128xf32, #tpu.memory_space<vmem>>, vector<1x128xf32>
    %4 = vector.broadcast %3 : vector<1x128xf32> to vector<8x128xf32>
    %5 = arith.addf %2, %4 : vector<8x128xf32>
    %6 = math.sin %5 : vector<8x128xf32>
    %c0_5 = arith.constant 0 : index
    %c0_6 = arith.constant 0 : index
    %7 = vector.load %arg5[%c0_5, %c0_6] : memref<8x128xf32, #tpu.memory_space<vmem>>, vector<8x128xf32>
    tpu.vector_store %arg5[%c0_5, %c0_6], %6 {strides = array<i32>} : memref<8x128xf32, #tpu.memory_space<vmem>>, vector<8x128xf32>,
    return
  }
  func.func @transform_0(%arg0: i32, %arg1: i32) -> (i32, i32) {
    %c0_i32 = arith.constant 0 : i32
    %c0_i32_0 = arith.constant 0 : i32
    return %arg1, %c0_i32 : i32, i32
  }
  func.func @transform_1(%arg0: i32, %arg1: i32) -> (i32, i32) {
    %c0_i32 = arith.constant 0 : i32
    %c0_i32_0 = arith.constant 0 : i32
    return %c0_i32, %arg0 : i32, i32
  }
  func.func @transform_2(%arg0: i32, %arg1: i32) -> (i32, i32) {
    %c0_i32 = arith.constant 0 : i32
    %c0_i32_0 = arith.constant 0 : i32
    return %c0_i32, %arg0 : i32, i32
  }
  func.func @transform_3(%arg0: i32, %arg1: i32) -> (i32, i32) {
    %c0_i32 = arith.constant 0 : i32
    return %arg1, %arg0 : i32, i32
  }
}

</mosaic_0001>

<llo_original>
// kernel: tpu_custom_call.1
$region0: #{tpu_custom_call.1}
  #allocation0 [shape = 'u32[]', space=smem, size = 0x4, offset = 0x4, fixed_abs, tag = 'smem constant byte address 0x4 - core index']
  #allocation1 [shape = 'u32[144,128]{1,0:T(1,128)}', space=vmem, size = 0x12000, scoped, tag = 'internal scratch']
  %s0 = inlined_call_operand.vmem [shape: f32[16,8], index: 0, kind: input, shape index: {}]
  %s1 = inlined_call_operand.vmem [shape: f32[8,128], index: 1, kind: input, shape index: {}]
  %s2 = inlined_call_operand.vmem [shape: f32[1,128], index: 2, kind: input, shape index: {}]
  %s3 = inlined_call_operand.hbm [shape: f32[16,128], index: 3, kind: output, shape index: {}]
  %s4 = sld [smem:[#allocation0]]
  $region45: #{tpu_custom_call.1} parent=0
    _
  %s6 = ssub.s32 1, %s4
  %s7 = scalar_select 0, %s6, %s4
  $region1: #{tpu_custom_call.1} parent=0
    #allocation2 [shape = 'u8[8192]{0}', space=vmem, size = 0x2000, scoped, tag = 'output window, operand 0']
    #allocation3 [shape = 's32[2]{0}', space=sflag, size = 0x8, scoped, tag = 'scoped memory for tpu_custom_call.1']
    %8 = vsyncpa [#allocation3], 0
    %s9 = scalar_lea.sflag [#allocation3], 1
    %10 = vsyncpa %s9, 0
    loop: start=0, step=1, limit=4
    $region2: #{tpu_custom_call.1} parent=1 // loop_pre_header
      _
    $region3: #{tpu_custom_call.1} parent=1 // loop_header
      %s12 = sphi 0, %s16
      %p13 = scmp.ge.s32.totalorder %s12, 4
      %s19 = sphi 0, %s31
      %s20 = sphi 0, %s27
      %s21 = sphi 0, %s19
      %s22 = sphi 0, %s20
      %s23 = sphi 0, %s21
      %s24 = sphi 0, %s22
      %s34 = sphi 0, %s36
      %s37 = sphi 0, %s34
      %s38 = sphi 0, %s37
      %s54 = sphi 0, %s38
      %s60 = sphi 0, %s62
      %s63 = sphi 0, %s60
      %s64 = sphi 0, %s63
      %s80 = sphi 0, %s64
      %s86 = sphi 0, %s88
      %s89 = sphi 0, %s86
      %s90 = sphi 0, %s89
      %s106 = sphi 0, %s90
      %s114 = sphi 0, %s116
      %s117 = sphi 0, %s114
      %s118 = sphi 0, %s117
      %s134 = sphi 0, %s118
    $region4: #{tpu_custom_call.1} parent=1 // loop_header_branch
      %15 = sbr.rel (%p13) target = $region8
    $region5: #{tpu_custom_call.1} parent=1 // loop_body
      %s17 = ssub.s32 %s12, 1
      %s18 = ssub.s32 %s12, 2
      %s25 = sadd.s32 1, %s20
      %p26 = scmp.ge.s32.totalorder %s25, 2
      %s27 = scalar_select %p26, 0, %s25
      %s28 = sadd.s32 1, %s19
      %s29 = scalar_select %p26, %s28, %s19
      %p30 = scmp.ge.s32.totalorder %s29, 1
      %s31 = scalar_select %p30, 0, %s29
      %s32 = ssub.s32 %s20, %s27
      %p33 = scmp.eq.s32.totalorder %s32, 0
      %s35 = sadd.s32 %s34, 1
      %s36 = scalar_select %p33, %s34, %s35
      %p39 = pneg %p33
      %p40 = scmp.eq.s32.totalorder %s12, 1
      %p41 = por %p39, %p40
      %p42 = scmp.ne.s32.totalorder %s34, %s37
      %p43 = scmp.eq.s32.totalorder %s12, 0
      %p44 = por %p42, %p43
      %p45 = scmp.ne.s32.totalorder %s34, %s37
      %p46 = scmp.eq.s32.totalorder %s17, 1
      %p47 = por %p45, %p46
      %p48 = scmp.ne.s32.totalorder %s37, %s38
      %p49 = scmp.eq.s32.totalorder %s17, 0
      %p50 = por %p48, %p49
      %p51 = scmp.ne.s32.totalorder %s37, %s38
      %p52 = scmp.eq.s32.totalorder %s18, 1
      %p53 = por %p51, %p52
      %p55 = scmp.ne.s32.totalorder %s38, %s54
      %p56 = scmp.eq.s32.totalorder %s18, 0
      %p57 = por %p55, %p56
      %s58 = ssub.s32 %s19, %s31
      %p59 = scmp.eq.s32.totalorder %s58, 0
      %s61 = sadd.s32 %s60, 1
      %s62 = scalar_select %p59, %s60, %s61
      %p65 = pneg %p59
      %p66 = scmp.eq.s32.totalorder %s12, 1
      %p67 = por %p65, %p66
      %p68 = scmp.ne.s32.totalorder %s60, %s63
      %p69 = scmp.eq.s32.totalorder %s12, 0
      %p70 = por %p68, %p69
      %p71 = scmp.ne.s32.totalorder %s60, %s63
      %p72 = scmp.eq.s32.totalorder %s17, 1
      %p73 = por %p71, %p72
      %p74 = scmp.ne.s32.totalorder %s63, %s64
      %p75 = scmp.eq.s32.totalorder %s17, 0
      %p76 = por %p74, %p75
      %p77 = scmp.ne.s32.totalorder %s63, %s64
      %p78 = scmp.eq.s32.totalorder %s18, 1
      %p79 = por %p77, %p78
      %p81 = scmp.ne.s32.totalorder %s64, %s80
      %p82 = scmp.eq.s32.totalorder %s18, 0
      %p83 = por %p81, %p82
      %s84 = ssub.s32 %s19, %s31
      %p85 = scmp.eq.s32.totalorder %s84, 0
      %s87 = sadd.s32 %s86, 1
      %s88 = scalar_select %p85, %s86, %s87
      %p91 = pneg %p85
      %p92 = scmp.eq.s32.totalorder %s12, 1
      %p93 = por %p91, %p92
      %p94 = scmp.ne.s32.totalorder %s86, %s89
      %p95 = scmp.eq.s32.totalorder %s12, 0
      %p96 = por %p94, %p95
      %p97 = scmp.ne.s32.totalorder %s86, %s89
      %p98 = scmp.eq.s32.totalorder %s17, 1
      %p99 = por %p97, %p98
      %p100 = scmp.ne.s32.totalorder %s89, %s90
      %p101 = scmp.eq.s32.totalorder %s17, 0
      %p102 = por %p100, %p101
      %p103 = scmp.ne.s32.totalorder %s89, %s90
      %p104 = scmp.eq.s32.totalorder %s18, 1
      %p105 = por %p103, %p104
      %p107 = scmp.ne.s32.totalorder %s90, %s106
      %p108 = scmp.eq.s32.totalorder %s18, 0
      %p109 = por %p107, %p108
      %s110 = ssub.s32 %s20, %s27
      %s111 = ssub.s32 %s19, %s31
      %s112 = sor.u32 %s110, %s111
      %p113 = scmp.eq.s32.totalorder %s112, 0
      %s115 = sadd.s32 %s114, 1
      %s116 = scalar_select %p113, %s114, %s115
      %p119 = pneg %p113
      %p120 = scmp.eq.s32.totalorder %s12, 1
      %p121 = por %p119, %p120
      %p122 = scmp.ne.s32.totalorder %s114, %s117
      %p123 = scmp.eq.s32.totalorder %s12, 0
      %p124 = por %p122, %p123
      %p125 = scmp.ne.s32.totalorder %s114, %s117
      %p126 = scmp.eq.s32.totalorder %s17, 1
      %p127 = por %p125, %p126
      %p128 = scmp.ne.s32.totalorder %s117, %s118
      %p129 = scmp.eq.s32.totalorder %s17, 0
      %p130 = por %p128, %p129
      %p131 = scmp.ne.s32.totalorder %s117, %s118
      %p132 = scmp.eq.s32.totalorder %s18, 1
      %p133 = por %p131, %p132
      %p135 = scmp.ne.s32.totalorder %s118, %s134
      %p136 = scmp.eq.s32.totalorder %s18, 0
      %p137 = por %p135, %p136
      %p138 = scmp.le.s32.totalorder 1, %s12
      %p139 = scmp.lt.s32.totalorder %s12, 3
      %p140 = pnand %p138, %p139
      %p141 = pneg %p140
      // Predicated region
      $region9: #{tpu_custom_call.1} parent=5 // pred_check
        _
      $region10: #{tpu_custom_call.1} parent=5 // pred_check_branch
        %143 = sbr.rel (%p140) target = $region12
      $region11: #{tpu_custom_call.1} parent=5 // pred_region
        %s144 = ssub.s32 %s12, 1
        // Predicated region
        $region13: #{tpu_custom_call.1} parent=11 // pred_check
          %p145 = pneg %p76
        $region14: #{tpu_custom_call.1} parent=11 // pred_check_branch
          %147 = sbr.rel (%p145) target = $region16
        $region15: #{tpu_custom_call.1} parent=11 // pred_region
          %p148 = scmp.lt.s32.totalorder %s21, 0
          %s149 = scalar_select %p148, %s21, 0
          %s150 = smul.addr %s149, 8
          %s151 = scalar_lea.vmem %s1, %s150
        $region16: #{tpu_custom_call.1} parent=11 // pred_fallthru
          _
        // Predicated region
        $region17: #{tpu_custom_call.1} parent=11 // pred_check
          %p152 = pneg %p102
        $region18: #{tpu_custom_call.1} parent=11 // pred_check_branch
          %154 = sbr.rel (%p152) target = $region20
        $region19: #{tpu_custom_call.1} parent=11 // pred_region
          %p155 = scmp.lt.s32.totalorder %s21, 0
          %s156 = scalar_select %p155, %s21, 0
          %s157 = scalar_lea.vmem %s2, %s156
        $region20: #{tpu_custom_call.1} parent=11 // pred_fallthru
          _
      $region12: #{tpu_custom_call.1} parent=5 // pred_fallthru
        _
      %p158 = scmp.lt.s32.totalorder %s12, 2
      // Predicated region
      $region21: #{tpu_custom_call.1} parent=5 // pred_check
        %p159 = pneg %p158
      $region22: #{tpu_custom_call.1} parent=5 // pred_check_branch
        %161 = sbr.rel (%p159) target = $region24
      $region23: #{tpu_custom_call.1} parent=5 // pred_region
        // Predicated region
        $region25: #{tpu_custom_call.1} parent=23 // pred_check
          %p162 = pneg %p44
        $region26: #{tpu_custom_call.1} parent=23 // pred_check_branch
          %164 = sbr.rel (%p162) target = $region28
        $region27: #{tpu_custom_call.1} parent=23 // pred_region
          %p165 = scmp.lt.s32.totalorder %s20, 1
          %s166 = scalar_select %p165, %s20, 1
          %s167 = smul.addr %s166, 8
          %s168 = scalar_lea.vmem %s0, %s167
        $region28: #{tpu_custom_call.1} parent=23 // pred_fallthru
          _
      $region24: #{tpu_custom_call.1} parent=5 // pred_fallthru
        _
      %p169 = scmp.le.s32.totalorder 1, %s12
      %p170 = scmp.lt.s32.totalorder %s12, 3
      %p171 = pnand %p169, %p170
      %p172 = pneg %p171
      // Predicated region
      $region29: #{tpu_custom_call.1} parent=5 // pred_check
        _
      $region30: #{tpu_custom_call.1} parent=5 // pred_check_branch
        %174 = sbr.rel (%p171) target = $region32
      $region31: #{tpu_custom_call.1} parent=5 // pred_region
        %s175 = ssub.s32 %s12, 1
        %p176 = scmp.lt.s32.totalorder %s22, 1
        %s177 = scalar_select %p176, %s22, 1
        %s178 = smul.addr %s177, 8
        %s179 = scalar_lea.vmem %s0, %s178
        %p180 = pneg %p50
        %p181 = pneg %p47
        %p182 = scmp.lt.s32.totalorder %s21, 0
        %s183 = scalar_select %p182, %s21, 0
        %s184 = smul.addr %s183, 8
        %s185 = scalar_lea.vmem %s1, %s184
        %p186 = pneg %p76
        %p187 = pneg %p73
        %p188 = scmp.lt.s32.totalorder %s21, 0
        %s189 = scalar_select %p188, %s21, 0
        %s190 = scalar_lea.vmem %s2, %s189
        %p191 = pneg %p102
        %p192 = pneg %p99
        %p193 = pneg %p130
        %p194 = pneg %p127
        %s195 = sand.u32 %s117, 1
        %s196 = scalar_lea.sflag [#allocation3], %s195
        %s197 = sand.u32 %s117, 1
        %s198 = smul.addr %s197, 8
        %s199 = scalar_lea.vmem [#allocation2], %s198
        %p200 = scmp.lt.s32.totalorder %s22, 1
        %s201 = scalar_select %p200, %s22, 1
        %s202 = smul.addr %s201, 8
        %s203 = scalar_lea.vmem %s0, %s202
        %p204 = scmp.lt.s32.totalorder %s21, 0
        %s205 = scalar_select %p204, %s21, 0
        %s206 = smul.addr %s205, 8
        %s207 = scalar_lea.vmem %s1, %s206
        %p208 = scmp.lt.s32.totalorder %s21, 0
        %s209 = scalar_select %p208, %s21, 0
        %s210 = scalar_lea.vmem %s2, %s209
        %v211 = vld [vmem:[%s203] sm:$0xff]
        %v212 = vld [vmem:[%s207] sm:$0xff]
        %v213 = vld [vmem:[%s210] sm:$0x1]
        %v215 = vlaneseq
        %v216 = vshrl.u32 %v215, 7
        %v217 = vsub.s32 0, %v216
        %v218 = vrot.slane %v213, %v217
        %vm220 = vcmask 64512
        %v222 = vsel %vm220, %v211, 0
        %224 = vmatprep.subr.mxu0 0.0
        %225 = vmatpush1.msra.mxu0 %v212
        %226 = vmatprep.subr.mxu0 0.0
        %227 = vmatpush1.msra.mxu0 0.0
        %228 = vmatprep.subr.mxu0 0.0
        %229 = vmatpush1.msra.mxu0 0.0
        %230 = vmatprep.subr.mxu0 0.0
        %231 = vmatpush1.msra.mxu0 0.0
        %232 = vmatprep.subr.mxu0 0.0
        %233 = vmatpush1.msra.mxu0 0.0
        %234 = vmatprep.subr.mxu0 0.0
        %235 = vmatpush1.msra.mxu0 0.0
        %236 = vmatprep.subr.mxu0 0.0
        %237 = vmatpush1.msra.mxu0 0.0
        %238 = vmatprep.subr.mxu0 0.0
        %239 = vmatpush1.msra.mxu0 0.0
        %240 = vmatprep.subr.mxu0 0.0
        %241 = vmatpush1.msra.mxu0 0.0
        %242 = vmatprep.subr.mxu0 0.0
        %243 = vmatpush1.msra.mxu0 0.0
        %244 = vmatprep.subr.mxu0 0.0
        %245 = vmatpush1.msra.mxu0 0.0
        %246 = vmatprep.subr.mxu0 0.0
        %247 = vmatpush1.msra.mxu0 0.0
        %248 = vmatprep.subr.mxu0 0.0
        %249 = vmatpush1.msra.mxu0 0.0
        %250 = vmatprep.subr.mxu0 0.0
        %251 = vmatpush1.msra.mxu0 0.0
        %252 = vmatprep.subr.mxu0 0.0
        %253 = vmatpush1.msra.mxu0 0.0
        %254 = vmatprep.subr.mxu0 0.0
        %255 = vmatpush1.msra.mxu0 0.0
        %256 = vmatprep.subr.mxu0 0.0
        %257 = vmatpush1.msra.mxu0 0.0
        %258 = vmatprep.subr.mxu0 0.0
        %259 = vmatpush1.msra.mxu0 0.0
        %260 = vmatprep.subr.mxu0 0.0
        %261 = vmatpush1.msra.mxu0 0.0
        %262 = vmatprep.subr.mxu0 0.0
        %263 = vmatpush1.msra.mxu0 0.0
        %264 = vmatprep.subr.mxu0 0.0
        %265 = vmatpush1.msra.mxu0 0.0
        %266 = vmatprep.subr.mxu0 0.0
        %267 = vmatpush1.msra.mxu0 0.0
        %268 = vmatprep.subr.mxu0 0.0
        %269 = vmatpush1.msra.mxu0 0.0
        %270 = vmatprep.subr.mxu0 0.0
        %271 = vmatpush1.msra.mxu0 0.0
        %272 = vmatprep.subr.mxu0 0.0
        %273 = vmatpush1.msra.mxu0 0.0
        %274 = vmatprep.subr.mxu0 0.0
        %275 = vmatpush1.msra.mxu0 0.0
        %276 = vmatprep.subr.mxu0 0.0
        %277 = vmatpush1.msra.mxu0 0.0
        %278 = vmatprep.subr.mxu0 0.0
        %279 = vmatpush1.msra.mxu0 0.0
        %280 = vmatprep.subr.mxu0 0.0
        %281 = vmatpush1.msra.mxu0 0.0
        %282 = vmatprep.subr.mxu0 0.0
        %283 = vmatpush1.msra.mxu0 0.0
        %284 = vmatprep.subr.mxu0 0.0
        %285 = vmatpush1.msra.mxu0 0.0
        %286 = vmatprep.subr.mxu0 0.0
        %287 = vmatpush1.msra.mxu0 0.0
        %288 = vmatprep.mubr.f32.mxu0 0.0
        %289 = vmatmul.mubr.f32.gmra.mrb[0].mxu0 %v222
        %v290 = vpop.f32.mrb[0].mxu0
        %v291 = vadd.f32 %v218, %v290
        %v292 = vpop.f32.mrb[0].mxu0
        %293 = vdwg.mxu0
        %v294 = vand.u32 2147483647, %v291
        %vm295 = vcmp.le.f32.partialorder %v294, 0.7853982
        %vm296 = vcmp.lt.s32.totalorder %v291, 0
        %v297 = vand.u32 %v291, 2139095040
        %v298 = vshrl.u32 %v297, 23
        %v299 = vsub.s32 %v298, 127
        %v300 = vand.u32 2147483647, %v291
        %v301 = vand.u32 %v300, 8388607
        %v302 = vor.u32 %v301, 8388608
        %v303 = vsub.s32 0, %v302
        %v304 = vadd.s32 %v299, 1
        %vm305 = vcmp.gt.s32.totalorder %v304, 0
        %v306 = vsel %vm305, %v304, 0
        %v307 = vshrl.u32 %v306, 5
        %v308 = vand.u32 %v306, 31
        %v309 = vsub.s32 32, %v308
        %v310 = vshrl.u32 683565275, %v309
        %v311 = vshll.u32 683565275, %v308
        %v312 = vshrl.u32 2475754826, %v309
        %v313 = vor.u32 %v311, %v312
        %v314 = vshll.u32 2475754826, %v308
        %v315 = vshrl.u32 2131351028, %v309
        %v316 = vor.u32 %v314, %v315
        %v317 = vshll.u32 2131351028, %v308
        %v318 = vshrl.u32 2102212464, %v309
        %v319 = vor.u32 %v317, %v318
        %v320 = vshll.u32 2102212464, %v308
        %v321 = vshrl.u32 920167782, %v309
        %v322 = vor.u32 %v320, %v321
        %v323 = vshll.u32 920167782, %v308
        %v324 = vshrl.u32 1326507024, %v309
        %v325 = vor.u32 %v323, %v324
        %vm326 = vcmp.lt.s32.totalorder %v307, 1
        %vm327 = vcmp.lt.s32.totalorder %v307, 2
        %vm328 = vcmp.lt.s32.totalorder %v307, 3
        %vm329 = vcmp.lt.s32.totalorder %v307, 4
        %v330 = vsel %vm326, %v310, %v313
        %v331 = vsel %vm329, %v319, 2102212464
        %v332 = vsel %vm328, %v316, %v331
        %v333 = vsel %vm327, %v330, %v332
        %v334 = vsel %vm326, %v313, %v316
        %v335 = vsel %vm329, %v322, 920167782
        %v336 = vsel %vm328, %v319, %v335
        %v337 = vsel %vm327, %v334, %v336
        %v338 = vsel %vm326, %v316, %v319
        %v339 = vsel %vm329, %v325, 1326507024
        %v340 = vsel %vm328, %v322, %v339
        %v341 = vsel %vm327, %v338, %v340
        %v342 = vshll.u32 %v302, 8
        %v343 = vmul.u32.u64.compose %v342, %v341
        %v344 = vextract.low.u32 %v343
        %v345 = vextract.high.u32 %v343
        %v346 = vmul.u32.u64.compose %v342, %v337
        %v347 = vextract.low.u32 %v346
        %v348 = vextract.high.u32 %v346
        %v349 = vmul.u32 %v342, %v333
        %v350 = vadd.s32 %v345, %v347
        %vm351 = vc.u32 %v345, %v347
        %v352 = vadd.s32 %v348, 1
        %v353 = vsel %vm351, %v352, %v348
        %v354 = vadd.s32 %v349, %v353
        %v355 = vadd.s32 %v354, 536870912
        %v356 = vshrl.u32 %v355, 30
        %v357 = vshll.u32 %v356, 30
        %v358 = vsub.s32 %v354, %v357
        %vm359 = vcmp.lt.s32.totalorder %v358, 0
        %v360 = vsub.s32 0, %v358
        %v361 = vsel %vm359, %v360, %v358
        %v362 = vclz %v361
        %v363 = vsub.s32 %v362, 2
        %vm364 = vcmp.gt.s32.totalorder 0, %v363
        %v365 = vsel %vm364, 0, %v363
        %v366 = vsub.s32 32, %v365
        %v367 = vshll.u32 %v358, %v365
        %v368 = vshrl.u32 %v350, %v366
        %v369 = vor.u32 %v367, %v368
        %v370 = vsub.s32 4294967266, %v365
        %v371 = vadd.s32 %v370, 127
        %v372 = vshll.u32 %v371, 23
        %v373 = vor.u32 4788187, %v372
        %v374 = vand.u32 2147483647, %v373
        %v376 = vcvt.s32.f32 %v369
        %v377 = vmul.f32 %v376, %v374
        %v378 = vxor.u32 %v377, 2147483648
        %v379 = vsel %vm296, %v378, %v377
        %v380 = vsub.s32 4, %v356
        %v381 = vsel %vm296, %v380, %v356
        %v382 = vsel %vm295, %v291, %v379
        %v383 = vsel %vm295, 0, %v381
        %v384 = vcosq.f32.pop %v382
        %v385 = vsinq.f32.pop %v382
        %vm386 = vweird.f32 %v291
        %v387 = vadd.s32 %v383, 3
        %v388 = vand.u32 %v387, 3
        %vm389 = vcmp.lt.s32.totalorder %v388, 2
        %vm390 = vcmp.eq.s32.totalorder %v388, 0
        %v391 = vxor.u32 %v385, 2147483648
        %v392 = vsel %vm390, %v384, %v391
        %vm393 = vcmp.eq.s32.totalorder %v388, 2
        %v394 = vxor.u32 %v384, 2147483648
        %v395 = vsel %vm393, %v394, %v385
        %v396 = vsel %vm389, %v392, %v395
        %v397 = vsel %vm386, nan, %v396
        %398 = vst [vmem:[%s199] sm:$0xff] %v397
        %s399 = sand.u32 %s117, 1
        %s400 = scalar_lea.sflag [#allocation3], %s399
        %s401 = sand.u32 %s117, 1
        %s402 = smul.addr %s401, 8
        %s403 = scalar_lea.vmem [#allocation2], %s402
        // Predicated region
        $region33: #{tpu_custom_call.1} parent=31 // pred_check
          %p404 = pneg %p127
        $region34: #{tpu_custom_call.1} parent=31 // pred_check_branch
          %406 = sbr.rel (%p404) target = $region36
        $region35: #{tpu_custom_call.1} parent=31 // pred_region
          %s408 = ssub.s32 128, 128
          %409 = vsyncadd %s400, %s408
          %s410 = sadd.s32 %s21, %s22
          %s411 = smul.addr %s410, 128
          %s412 = scalar_lea.hbm %s3, %s411
          %s414 = sshll.u32 %s403, 4
          %s415 = int_to_ptr.vmem [resolvable:$true] %s414
          %417 = dma.vmem_to_hbm [thread:$0]  %s415, 128, %s412, %s400
        $region36: #{tpu_custom_call.1} parent=31 // pred_fallthru
          _
      $region32: #{tpu_custom_call.1} parent=5 // pred_fallthru
        _
      %p418 = scmp.le.s32.totalorder 2, %s12
      // Predicated region
      $region37: #{tpu_custom_call.1} parent=5 // pred_check
        %p419 = pneg %p418
      $region38: #{tpu_custom_call.1} parent=5 // pred_check_branch
        %421 = sbr.rel (%p419) target = $region40
      $region39: #{tpu_custom_call.1} parent=5 // pred_region
        %s422 = ssub.s32 %s12, 2
        // Predicated region
        $region41: #{tpu_custom_call.1} parent=39 // pred_check
          %p423 = pneg %p133
        $region42: #{tpu_custom_call.1} parent=39 // pred_check_branch
          %425 = sbr.rel (%p423) target = $region44
        $region43: #{tpu_custom_call.1} parent=39 // pred_region
          %s426 = sand.u32 %s118, 1
          %s427 = scalar_lea.sflag [#allocation3], %s426
          %s428 = sand.u32 %s118, 1
          %s429 = smul.addr %s428, 8
          %s430 = scalar_lea.vmem [#allocation2], %s429
          %431 = dma.done %s427, 128
        $region44: #{tpu_custom_call.1} parent=39 // pred_fallthru
          _
      $region40: #{tpu_custom_call.1} parent=5 // pred_fallthru
        _
    $region6: #{tpu_custom_call.1} parent=1 // loop_footer
      %s16 = sadd.s32 1, %s12
    $region7: #{tpu_custom_call.1} parent=1 // loop_footer_branch
      %11 = sbr.rel target = $region3
    $region8: #{tpu_custom_call.1} parent=1 // loop_exit
      _
    %432 = vsyncpa [#allocation3], 1
    %s433 = scalar_lea.sflag [#allocation3], 1
    %434 = vsyncpa %s433, 1

</llo_original>
